<compile_context>
chip_gen: v5e
topology: v5e:2x2
jax: 0.10.0
libtpu: 0.0.40
codegen_flags: <defaults>
</compile_context>

<pallas_src>
import jax
import jax.numpy as jnp
import numpy as np
from jax.experimental import pallas as pl
from jax.experimental.pallas import tpu as pltpu

# ---- hyper-parameters (WaveletCNN defaults, num_classes chosen here) ----
NUM_CLASSES   = 5
WAVELET_LEVEL = 2
CONV_CHANNELS = 8
KERNEL_SIZE   = 3
TOKEN_LEN     = 1
IN_CHANNELS   = 1
NUM_PIPELINES = 1 + WAVELET_LEVEL
BN_EPS        = 1e-5
IN_EPS        = 1e-5
LEAKY_SLOPE   = 0.01


# ----------------------------- Pallas kernel ------------------------------

def _wavelet_cnn_kernel(xp_ref, cw_ref, fcv_ref, fcb_ref, o_ref):
    """xp_ref: (8, TB, m) mod-8 phase slabs of the raw signal (f32, VMEM)
       cw_ref: (12, C) SMEM scalars: rows 4*p+{0,1,2,3} = [w0,w1,w2,shift] with
               eval-mode BatchNorm folded in
       fcv_ref: (C, P, N) fc weights pre-scaled by 1/pooled_len[p]
       fcb_ref: (1, N) fc bias
       o_ref:  (TB, N) logits block
    """
    TB = xp_ref.shape[1]
    m  = xp_ref.shape[2]
    C  = fcv_ref.shape[0]
    N  = fcv_ref.shape[2]
    L  = 8 * m
    inv_sqrt2 = 0.7071067811865476

    # ---- InstanceNorm1d(affine=False): per-row stats over the whole signal --
    ph = [xp_ref[k] for k in range(8)]                       # 8 x (TB, m)
    tot = ph[0]
    for k in range(1, 8):
        tot = tot + ph[k]
    mu = jnp.sum(tot, axis=-1, keepdims=True) * (1.0 / L)    # (TB, 1)
    xc = [p - mu for p in ph]
    sq = xc[0] * xc[0]
    for k in range(1, 8):
        sq = sq + xc[k] * xc[k]
    var = jnp.sum(sq, axis=-1, keepdims=True) * (1.0 / L)
    inv_std = jax.lax.rsqrt(var + IN_EPS)
    n = [v * inv_std for v in xc]                            # normalized phases

    # ---- 2-level haar wavedec (mode='zero') entirely on the VPU -------------
    # slabs (each (TB, m)):  cA2 even/odd, cD2 even/odd, cD1 phases mod-4
    ae = (n[0] + n[1] + n[2] + n[3]) * 0.5                   # cA2[2u]
    ao = (n[4] + n[5] + n[6] + n[7]) * 0.5                   # cA2[2u+1]
    de = (n[0] + n[1] - n[2] - n[3]) * 0.5                   # cD2[2u]
    do = (n[4] + n[5] - n[6] - n[7]) * 0.5                   # cD2[2u+1]
    d0 = (n[0] - n[1]) * inv_sqrt2                           # cD1[4u+0]
    d1 = (n[2] - n[3]) * inv_sqrt2                           # cD1[4u+1]
    d2 = (n[4] - n[5]) * inv_sqrt2                           # cD1[4u+2]
    d3 = (n[6] - n[7]) * inv_sqrt2                           # cD1[4u+3]

    # shifted neighbours with the conv's zero padding built in (hoisted out of
    # the channel loop; channel independent).
    zcol = jnp.zeros((TB, 1), jnp.float32)

    def shift_r(x):   # y[t] = x[t-1], y[0] = 0
        return jnp.concatenate([zcol, x[:, :-1]], axis=1)

    def shift_l(x):   # y[t] = x[t+1], y[m-1] = 0
        return jnp.concatenate([x[:, 1:], zcol], axis=1)

    ao_prev, ae_next = shift_r(ao), shift_l(ae)
    do_prev, de_next = shift_r(do), shift_l(de)
    d3_prev, d0_next = shift_r(d3), shift_l(d0)

    def lrelu(y):
        return jnp.maximum(y, LEAKY_SLOPE * y)

    # ---- per-channel Conv1d(1->C,k=3,pad=1)+BN+LeakyReLU+MaxPool(2)
    #      + AdaptiveAvgPool(1) + Linear, accumulated as rank-1 updates --------
    def chan_body(c, acc):
        aw0, aw1, aw2, ash = cw_ref[0, c], cw_ref[1, c], cw_ref[2, c], cw_ref[3, c]
        bw0, bw1, bw2, bsh = cw_ref[4, c], cw_ref[5, c], cw_ref[6, c], cw_ref[7, c]
        gw0, gw1, gw2, gsh = cw_ref[8, c], cw_ref[9, c], cw_ref[10, c], cw_ref[11, c]

        # pipeline 0: cA2 segment (even/odd positions -> MaxPool pair max)
        pA = jnp.maximum(lrelu(aw0 * ao_prev + aw1 * ae + aw2 * ao + ash),
                         lrelu(aw0 * ae + aw1 * ao + aw2 * ae_next + ash))
        # pipeline 1: cD2 segment
        pB = jnp.maximum(lrelu(bw0 * do_prev + bw1 * de + bw2 * do + bsh),
                         lrelu(bw0 * de + bw1 * do + bw2 * de_next + bsh))
        # pipeline 2: cD1 segment (4 interleaved phases -> 2 pooled phases)
        y0 = lrelu(gw0 * d3_prev + gw1 * d0 + gw2 * d1 + gsh)
        y1 = lrelu(gw0 * d0 + gw1 * d1 + gw2 * d2 + gsh)
        y2 = lrelu(gw0 * d1 + gw1 * d2 + gw2 * d3 + gsh)
        y3 = lrelu(gw0 * d2 + gw1 * d3 + gw2 * d0_next + gsh)
        pC = jnp.maximum(y0, y1) + jnp.maximum(y2, y3)

        sA = jnp.sum(pA, axis=-1, keepdims=True)             # (TB, 1)
        sB = jnp.sum(pB, axis=-1, keepdims=True)
        sC = jnp.sum(pC, axis=-1, keepdims=True)

        fcs = fcv_ref[c]                                     # (P, N), 1/pool_len folded
        return acc + sA * fcs[0:1, :] + sB * fcs[1:2, :] + sC * fcs[2:3, :]

    acc = jax.lax.fori_loop(0, C, chan_body, jnp.zeros((TB, N), jnp.float32))
    o_ref[...] = acc + fcb_ref[...]


# --------------------------- parameter folding -----------------------------

def fold_params(params, L):
    """Host-side, one-time folding of module params into kernel operands."""
    assert WAVELET_LEVEL == 2
    assert L % (2 ** (WAVELET_LEVEL + 1)) == 0, "L must be a multiple of 8"
    P, C, N = NUM_PIPELINES, CONV_CHANNELS, NUM_CLASSES
    m = L // 8

    conv_w = np.asarray(params["conv_w"], np.float64)        # (P, C, 3)
    conv_b = np.asarray(params["conv_b"], np.float64)        # (P, C)
    gamma  = np.asarray(params["bn_gamma"], np.float64)
    beta   = np.asarray(params["bn_beta"], np.float64)
    mean   = np.asarray(params["bn_mean"], np.float64)
    var    = np.asarray(params["bn_var"], np.float64)

    scale = gamma / np.sqrt(var + BN_EPS)                    # (P, C)
    shift = (conv_b - mean) * scale + beta                   # (P, C)
    w_eff = conv_w * scale[..., None]                        # (P, C, 3)

    cw = np.zeros((4 * P, C), np.float32)                    # SMEM scalar table
    for p in range(P):
        cw[4 * p + 0] = w_eff[p, :, 0]
        cw[4 * p + 1] = w_eff[p, :, 1]
        cw[4 * p + 2] = w_eff[p, :, 2]
        cw[4 * p + 3] = shift[p, :]

    # fc weights, feature index = p*C + c, pre-scaled by 1/(MaxPool'd length)
    pooled_len = np.array([m, m, 2 * m], np.float64)
    fc_w = np.asarray(params["fc_w"], np.float64).reshape(N, P, C)
    fcv = np.transpose(fc_w, (2, 1, 0)) / pooled_len[None, :, None]   # (C, P, N)
    fcb = np.asarray(params["fc_b"], np.float32).reshape(1, N)

    return dict(cw=jnp.asarray(cw),
                fcv=jnp.asarray(fcv.astype(np.float32)),
                fcb=jnp.asarray(fcb))


# ------------------------------ forward ------------------------------------

def wavelet_cnn_forward(x, folded):
    """x: (B, 1, L) float32 (PyTorch NCL). Returns logits (B, NUM_CLASSES)."""
    B, Cin, L = x.shape
    assert Cin == IN_CHANNELS == 1
    assert L % (2 ** (WAVELET_LEVEL + 1)) == 0, "L must be a multiple of 8"
    m = L // 8
    x2d = x.reshape(B, L).astype(jnp.float32)

    # pad batch to a multiple of the row block (f32 sublane = 8)
    TB = 8 if B <= 128 else 128
    B_pad = ((B + TB - 1) // TB) * TB
    if B_pad != B:
        x2d = jnp.concatenate([x2d, jnp.zeros((B_pad - B, L), jnp.float32)], 0)

    # mod-8 phase split (wrapper-side layout plumbing only): the in-kernel haar
    # is then pure elementwise VPU work with no lane gathers / dense matrices.
    xp = jnp.transpose(x2d.reshape(B_pad, m, 8), (2, 0, 1))   # (8, B_pad, m)

    P, C, N = NUM_PIPELINES, CONV_CHANNELS, NUM_CLASSES
    grid = (B_pad // TB,)
    out = pl.pallas_call(
        _wavelet_cnn_kernel,
        out_shape=jax.ShapeDtypeStruct((B_pad, N), jnp.float32),
        grid=grid,
        in_specs=[
            pl.BlockSpec((8, TB, m), lambda i: (0, i, 0)),               # signal block
            pl.BlockSpec(memory_space=pltpu.MemorySpace.SMEM),           # taps/shift
            pl.BlockSpec((C, P, N), lambda i: (0, 0, 0)),                # fc weights
            pl.BlockSpec((1, N), lambda i: (0, 0)),                      # fc bias
        ],
        out_specs=pl.BlockSpec((TB, N), lambda i: (i, 0)),
        compiler_params=pltpu.CompilerParams(
            dimension_semantics=("parallel",)),
    )(xp, folded["cw"], folded["fcv"], folded["fcb"])
    return out[:B]


# ------------------------- reference + params ------------------------------

def haar_wavedec(x2d, level):
    """ptwt.wavedec(x, 'haar', mode='zero', level=level) for even lengths."""
    inv_sqrt2 = float(1.0 / np.sqrt(2.0))
    details = []
    a = x2d
    for _ in range(level):
        B, Lc = a.shape
        pairs = a.reshape(B, Lc // 2, 2)
        cA = (pairs[..., 0] + pairs[..., 1]) * inv_sqrt2
        cD = (pairs[..., 0] - pairs[..., 1]) * inv_sqrt2
        details.append(cD)
        a = cA
    return [a] + details[::-1]


def reference_forward(x, params):
    """Pure-JAX reference of the same forward pass (for correctness check)."""
    B, _, L = x.shape
    x2d = x.reshape(B, L)
    mean = x2d.mean(-1, keepdims=True)
    var = jnp.square(x2d - mean).mean(-1, keepdims=True)
    x2d = (x2d - mean) / jnp.sqrt(var + IN_EPS)
    x2d = x2d[:, :(L // 2 ** WAVELET_LEVEL) * 2 ** WAVELET_LEVEL]
    coeffs = haar_wavedec(x2d, WAVELET_LEVEL)
    scale = params["bn_gamma"] / jnp.sqrt(params["bn_var"] + BN_EPS)
    shift = (params["conv_b"] - params["bn_mean"]) * scale + params["bn_beta"]
    feats = []
    for p, cf in enumerate(coeffs):
        Bc, Lc = cf.shape
        xp = jnp.pad(cf, ((0, 0), (1, 1)))
        taps = jnp.stack([xp[:, 0:Lc], xp[:, 1:Lc + 1], xp[:, 2:Lc + 2]], -1)
        y = jnp.einsum("blk,ck->bcl", taps, params["conv_w"][p])
        y = y * scale[p][None, :, None] + shift[p][None, :, None]
        y = jnp.where(y > 0, y, LEAKY_SLOPE * y)
        y = y.reshape(Bc, CONV_CHANNELS, Lc // 2, 2).max(-1)
        feats.append(y.mean(-1))
    feat = jnp.concatenate(feats, axis=1)
    return feat @ params["fc_w"].T + params["fc_b"]


def init_params(key):
    # deterministic synthetic parameters (BN stats perturbed to exercise folding)
    k0, k1, k2, k3, k4, k5, k6, k7 = jax.random.split(key, 8)
    P, C = NUM_PIPELINES, CONV_CHANNELS
    F = P * C * TOKEN_LEN
    return dict(
        conv_w=0.3 * jax.random.normal(k0, (P, C, KERNEL_SIZE), jnp.float32),
        conv_b=0.1 * jax.random.normal(k1, (P, C), jnp.float32),
        bn_gamma=1.0 + 0.1 * jax.random.normal(k4, (P, C), jnp.float32),
        bn_beta=0.05 * jax.random.normal(k5, (P, C), jnp.float32),
        bn_mean=0.1 * jax.random.normal(k6, (P, C), jnp.float32),
        bn_var=1.0 + 0.1 * jax.random.uniform(k7, (P, C), jnp.float32),
        fc_w=0.2 * jax.random.normal(k2, (NUM_CLASSES, F), jnp.float32),
        fc_b=0.1 * jax.random.normal(k3, (NUM_CLASSES,), jnp.float32),
    )


if __name__ == "__main__":
    key = jax.random.PRNGKey(0)
    kx, kp = jax.random.split(key)
    B, L = 8, 512                       # sublane-full batch, small 1D signal
    x = jax.random.normal(kx, (B, IN_CHANNELS, L), jnp.float32)
    params = init_params(kp)

    folded = fold_params(params, L)     # one-time host-side parameter folding
    logits = jax.block_until_ready(wavelet_cnn_forward(x, folded))
    ref = reference_forward(x, params)
    assert logits.shape == (B, NUM_CLASSES)
    np.testing.assert_allclose(np.asarray(logits), np.asarray(ref),
                               rtol=1e-3, atol=2e-3)
    print("KERNEL_OK")
</pallas_src>

<mosaic_0001>
module attributes {stable_mosaic.version = 11 : i64} {
  func.func @_wavelet_cnn_kernel(%arg0: i32, %arg1: memref<8x8x64xf32, #tpu.memory_space<vmem>>, %arg2: memref<12x8xf32, #tpu.memory_space<smem>>, %arg3: memref<8x3x5xf32, #tpu.memory_space<vmem>>, %arg4: memref<1x5xf32, #tpu.memory_space<vmem>>, %arg5: memref<8x5xf32, #tpu.memory_space<vmem>>) attributes {dimension_semantics = [#tpu.dimension_semantics<parallel>], iteration_bounds = array<i64: 1>, scalar_prefetch = 0 : i64, scratch_operands = 0 : i64, tpu.core_type = #tpu.core_type<tc>, window_params = [{transform_indices = @transform_0, window_bounds = array<i64: 8, 8, 64>}, {transform_indices = @transform_1, window_bounds = array<i64: 12, 8>}, {pipeline_mode = #tpu.pipeline_mode<synchronous>, transform_indices = @transform_2, window_bounds = array<i64: 8, 3, 5>}, {pipeline_mode = #tpu.pipeline_mode<synchronous>, transform_indices = @transform_3, window_bounds = array<i64: 1, 5>}, {transform_indices = @transform_4, window_bounds = array<i64: 8, 5>}]} {
    %c0 = arith.constant 0 : index
    %c0_0 = arith.constant 0 : index
    %c0_1 = arith.constant 0 : index
    %0 = vector.load %arg1[%c0, %c0_0, %c0_1] : memref<8x8x64xf32, #tpu.memory_space<vmem>>, vector<1x8x64xf32>
    %1 = vector.shape_cast %0 : vector<1x8x64xf32> to vector<8x64xf32>
    %c1 = arith.constant 1 : index
    %c0_2 = arith.constant 0 : index
    %c0_3 = arith.constant 0 : index
    %2 = vector.load %arg1[%c1, %c0_2, %c0_3] : memref<8x8x64xf32, #tpu.memory_space<vmem>>, vector<1x8x64xf32>
    %3 = vector.shape_cast %2 : vector<1x8x64xf32> to vector<8x64xf32>
    %c2 = arith.constant 2 : index
    %c0_4 = arith.constant 0 : index
    %c0_5 = arith.constant 0 : index
    %4 = vector.load %arg1[%c2, %c0_4, %c0_5] : memref<8x8x64xf32, #tpu.memory_space<vmem>>, vector<1x8x64xf32>
    %5 = vector.shape_cast %4 : vector<1x8x64xf32> to vector<8x64xf32>
    %c3 = arith.constant 3 : index
    %c0_6 = arith.constant 0 : index
    %c0_7 = arith.constant 0 : index
    %6 = vector.load %arg1[%c3, %c0_6, %c0_7] : memref<8x8x64xf32, #tpu.memory_space<vmem>>, vector<1x8x64xf32>
    %7 = vector.shape_cast %6 : vector<1x8x64xf32> to vector<8x64xf32>
    %c4 = arith.constant 4 : index
    %c0_8 = arith.constant 0 : index
    %c0_9 = arith.constant 0 : index
    %8 = vector.load %arg1[%c4, %c0_8, %c0_9] : memref<8x8x64xf32, #tpu.memory_space<vmem>>, vector<1x8x64xf32>
    %9 = vector.shape_cast %8 : vector<1x8x64xf32> to vector<8x64xf32>
    %c5 = arith.constant 5 : index
    %c0_10 = arith.constant 0 : index
    %c0_11 = arith.constant 0 : index
    %10 = vector.load %arg1[%c5, %c0_10, %c0_11] : memref<8x8x64xf32, #tpu.memory_space<vmem>>, vector<1x8x64xf32>
    %11 = vector.shape_cast %10 : vector<1x8x64xf32> to vector<8x64xf32>
    %c6 = arith.constant 6 : index
    %c0_12 = arith.constant 0 : index
    %c0_13 = arith.constant 0 : index
    %12 = vector.load %arg1[%c6, %c0_12, %c0_13] : memref<8x8x64xf32, #tpu.memory_space<vmem>>, vector<1x8x64xf32>
    %13 = vector.shape_cast %12 : vector<1x8x64xf32> to vector<8x64xf32>
    %c7 = arith.constant 7 : index
    %c0_14 = arith.constant 0 : index
    %c0_15 = arith.constant 0 : index
    %14 = vector.load %arg1[%c7, %c0_14, %c0_15] : memref<8x8x64xf32, #tpu.memory_space<vmem>>, vector<1x8x64xf32>
    %15 = vector.shape_cast %14 : vector<1x8x64xf32> to vector<8x64xf32>
    %16 = arith.addf %1, %3 : vector<8x64xf32>
    %17 = arith.addf %16, %5 : vector<8x64xf32>
    %18 = arith.addf %17, %7 : vector<8x64xf32>
    %19 = arith.addf %18, %9 : vector<8x64xf32>
    %20 = arith.addf %19, %11 : vector<8x64xf32>
    %21 = arith.addf %20, %13 : vector<8x64xf32>
    %22 = arith.addf %21, %15 : vector<8x64xf32>
    %cst = arith.constant dense<0.000000e+00> : vector<8xf32>
    %23 = vector.multi_reduction <add>, %22, %cst [1] : vector<8x64xf32> to vector<8xf32>
    %24 = vector.shape_cast %23 : vector<8xf32> to vector<8x1xf32>
    %cst_16 = arith.constant 0.001953125 : f32
    %25 = vector.broadcast %cst_16 : f32 to vector<8x1xf32>
    %26 = arith.mulf %24, %25 : vector<8x1xf32>
    %27 = vector.broadcast %26 : vector<8x1xf32> to vector<8x64xf32>
    %28 = arith.subf %1, %27 : vector<8x64xf32>
    %29 = vector.broadcast %26 : vector<8x1xf32> to vector<8x64xf32>
    %30 = arith.subf %3, %29 : vector<8x64xf32>
    %31 = vector.broadcast %26 : vector<8x1xf32> to vector<8x64xf32>
    %32 = arith.subf %5, %31 : vector<8x64xf32>
    %33 = vector.broadcast %26 : vector<8x1xf32> to vector<8x64xf32>
    %34 = arith.subf %7, %33 : vector<8x64xf32>
    %35 = vector.broadcast %26 : vector<8x1xf32> to vector<8x64xf32>
    %36 = arith.subf %9, %35 : vector<8x64xf32>
    %37 = vector.broadcast %26 : vector<8x1xf32> to vector<8x64xf32>
    %38 = arith.subf %11, %37 : vector<8x64xf32>
    %39 = vector.broadcast %26 : vector<8x1xf32> to vector<8x64xf32>
    %40 = arith.subf %13, %39 : vector<8x64xf32>
    %41 = vector.broadcast %26 : vector<8x1xf32> to vector<8x64xf32>
    %42 = arith.subf %15, %41 : vector<8x64xf32>
    %43 = arith.mulf %28, %28 : vector<8x64xf32>
    %44 = arith.mulf %30, %30 : vector<8x64xf32>
    %45 = arith.addf %43, %44 : vector<8x64xf32>
    %46 = arith.mulf %32, %32 : vector<8x64xf32>
    %47 = arith.addf %45, %46 : vector<8x64xf32>
    %48 = arith.mulf %34, %34 : vector<8x64xf32>
    %49 = arith.addf %47, %48 : vector<8x64xf32>
    %50 = arith.mulf %36, %36 : vector<8x64xf32>
    %51 = arith.addf %49, %50 : vector<8x64xf32>
    %52 = arith.mulf %38, %38 : vector<8x64xf32>
    %53 = arith.addf %51, %52 : vector<8x64xf32>
    %54 = arith.mulf %40, %40 : vector<8x64xf32>
    %55 = arith.addf %53, %54 : vector<8x64xf32>
    %56 = arith.mulf %42, %42 : vector<8x64xf32>
    %57 = arith.addf %55, %56 : vector<8x64xf32>
    %cst_17 = arith.constant dense<0.000000e+00> : vector<8xf32>
    %58 = vector.multi_reduction <add>, %57, %cst_17 [1] : vector<8x64xf32> to vector<8xf32>
    %59 = vector.shape_cast %58 : vector<8xf32> to vector<8x1xf32>
    %cst_18 = arith.constant 0.001953125 : f32
    %60 = vector.broadcast %cst_18 : f32 to vector<8x1xf32>
    %61 = arith.mulf %59, %60 : vector<8x1xf32>
    %cst_19 = arith.constant 9.99999974E-6 : f32
    %62 = vector.broadcast %cst_19 : f32 to vector<8x1xf32>
    %63 = arith.addf %61, %62 : vector<8x1xf32>
    %64 = math.rsqrt %63 : vector<8x1xf32>
    %65 = vector.broadcast %64 : vector<8x1xf32> to vector<8x64xf32>
    %66 = arith.mulf %28, %65 : vector<8x64xf32>
    %67 = vector.broadcast %64 : vector<8x1xf32> to vector<8x64xf32>
    %68 = arith.mulf %30, %67 : vector<8x64xf32>
    %69 = vector.broadcast %64 : vector<8x1xf32> to vector<8x64xf32>
    %70 = arith.mulf %32, %69 : vector<8x64xf32>
    %71 = vector.broadcast %64 : vector<8x1xf32> to vector<8x64xf32>
    %72 = arith.mulf %34, %71 : vector<8x64xf32>
    %73 = vector.broadcast %64 : vector<8x1xf32> to vector<8x64xf32>
    %74 = arith.mulf %36, %73 : vector<8x64xf32>
    %75 = vector.broadcast %64 : vector<8x1xf32> to vector<8x64xf32>
    %76 = arith.mulf %38, %75 : vector<8x64xf32>
    %77 = vector.broadcast %64 : vector<8x1xf32> to vector<8x64xf32>
    %78 = arith.mulf %40, %77 : vector<8x64xf32>
    %79 = vector.broadcast %64 : vector<8x1xf32> to vector<8x64xf32>
    %80 = arith.mulf %42, %79 : vector<8x64xf32>
    %81 = arith.addf %66, %68 : vector<8x64xf32>
    %82 = arith.addf %81, %70 : vector<8x64xf32>
    %83 = arith.addf %82, %72 : vector<8x64xf32>
    %cst_20 = arith.constant 5.000000e-01 : f32
    %84 = vector.broadcast %cst_20 : f32 to vector<8x64xf32>
    %85 = arith.mulf %83, %84 : vector<8x64xf32>
    %86 = arith.addf %74, %76 : vector<8x64xf32>
    %87 = arith.addf %86, %78 : vector<8x64xf32>
    %88 = arith.addf %87, %80 : vector<8x64xf32>
    %cst_21 = arith.constant 5.000000e-01 : f32
    %89 = vector.broadcast %cst_21 : f32 to vector<8x64xf32>
    %90 = arith.mulf %88, %89 : vector<8x64xf32>
    %91 = arith.addf %66, %68 : vector<8x64xf32>
    %92 = arith.subf %91, %70 : vector<8x64xf32>
    %93 = arith.subf %92, %72 : vector<8x64xf32>
    %cst_22 = arith.constant 5.000000e-01 : f32
    %94 = vector.broadcast %cst_22 : f32 to vector<8x64xf32>
    %95 = arith.mulf %93, %94 : vector<8x64xf32>
    %96 = arith.addf %74, %76 : vector<8x64xf32>
    %97 = arith.subf %96, %78 : vector<8x64xf32>
    %98 = arith.subf %97, %80 : vector<8x64xf32>
    %cst_23 = arith.constant 5.000000e-01 : f32
    %99 = vector.broadcast %cst_23 : f32 to vector<8x64xf32>
    %100 = arith.mulf %98, %99 : vector<8x64xf32>
    %101 = arith.subf %66, %68 : vector<8x64xf32>
    %cst_24 = arith.constant 0.707106769 : f32
    %102 = vector.broadcast %cst_24 : f32 to vector<8x64xf32>
    %103 = arith.mulf %101, %102 : vector<8x64xf32>
    %104 = arith.subf %70, %72 : vector<8x64xf32>
    %cst_25 = arith.constant 0.707106769 : f32
    %105 = vector.broadcast %cst_25 : f32 to vector<8x64xf32>
    %106 = arith.mulf %104, %105 : vector<8x64xf32>
    %107 = arith.subf %74, %76 : vector<8x64xf32>
    %cst_26 = arith.constant 0.707106769 : f32
    %108 = vector.broadcast %cst_26 : f32 to vector<8x64xf32>
    %109 = arith.mulf %107, %108 : vector<8x64xf32>
    %110 = arith.subf %78, %80 : vector<8x64xf32>
    %cst_27 = arith.constant 0.707106769 : f32
    %111 = vector.broadcast %cst_27 : f32 to vector<8x64xf32>
    %112 = arith.mulf %110, %111 : vector<8x64xf32>
    %cst_28 = arith.constant 0.000000e+00 : f32
    %113 = vector.broadcast %cst_28 : f32 to vector<8x1xf32>
    %114 = vector.extract_strided_slice %90 {offsets = [0, 0], sizes = [8, 63], strides = [1, 1]} : vector<8x64xf32> to vector<8x63xf32>
    %115 = tpu.concatenate %113, %114 in 1 : vector<8x1xf32>, vector<8x63xf32> -> vector<8x64xf32>
    %116 = vector.extract_strided_slice %85 {offsets = [0, 1], sizes = [8, 63], strides = [1, 1]} : vector<8x64xf32> to vector<8x63xf32>
    %117 = tpu.concatenate %116, %113 in 1 : vector<8x63xf32>, vector<8x1xf32> -> vector<8x64xf32>
    %118 = vector.extract_strided_slice %100 {offsets = [0, 0], sizes = [8, 63], strides = [1, 1]} : vector<8x64xf32> to vector<8x63xf32>
    %119 = tpu.concatenate %113, %118 in 1 : vector<8x1xf32>, vector<8x63xf32> -> vector<8x64xf32>
    %120 = vector.extract_strided_slice %95 {offsets = [0, 1], sizes = [8, 63], strides = [1, 1]} : vector<8x64xf32> to vector<8x63xf32>
    %121 = tpu.concatenate %120, %113 in 1 : vector<8x63xf32>, vector<8x1xf32> -> vector<8x64xf32>
    %122 = vector.extract_strided_slice %112 {offsets = [0, 0], sizes = [8, 63], strides = [1, 1]} : vector<8x64xf32> to vector<8x63xf32>
    %123 = tpu.concatenate %113, %122 in 1 : vector<8x1xf32>, vector<8x63xf32> -> vector<8x64xf32>
    %124 = vector.extract_strided_slice %103 {offsets = [0, 1], sizes = [8, 63], strides = [1, 1]} : vector<8x64xf32> to vector<8x63xf32>
    %125 = tpu.concatenate %124, %113 in 1 : vector<8x63xf32>, vector<8x1xf32> -> vector<8x64xf32>
    %cst_29 = arith.constant 0.000000e+00 : f32
    %126 = vector.broadcast %cst_29 : f32 to vector<8x5xf32>
    %c0_i32 = arith.constant 0 : i32
    %c8_i32 = arith.constant 8 : i32
    %127 = arith.addi %c0_i32, %c8_i32 : i32
    %c1_i32 = arith.constant 1 : i32
    %128 = scf.for %arg6 = %c0_i32 to %127 step %c1_i32 iter_args(%arg7 = %126) -> (vector<8x5xf32>)  : i32 {
      %c0_35 = arith.constant 0 : index
      %133 = arith.index_cast %arg6 : i32 to index
      %134 = memref.load %arg2[%c0_35, %133] : memref<12x8xf32, #tpu.memory_space<smem>>
      %c1_36 = arith.constant 1 : index
      %135 = arith.index_cast %arg6 : i32 to index
      %136 = memref.load %arg2[%c1_36, %135] : memref<12x8xf32, #tpu.memory_space<smem>>
      %c2_37 = arith.constant 2 : index
      %137 = arith.index_cast %arg6 : i32 to index
      %138 = memref.load %arg2[%c2_37, %137] : memref<12x8xf32, #tpu.memory_space<smem>>
      %c3_38 = arith.constant 3 : index
      %139 = arith.index_cast %arg6 : i32 to index
      %140 = memref.load %arg2[%c3_38, %139] : memref<12x8xf32, #tpu.memory_space<smem>>
      %c4_39 = arith.constant 4 : index
      %141 = arith.index_cast %arg6 : i32 to index
      %142 = memref.load %arg2[%c4_39, %141] : memref<12x8xf32, #tpu.memory_space<smem>>
      %c5_40 = arith.constant 5 : index
      %143 = arith.index_cast %arg6 : i32 to index
      %144 = memref.load %arg2[%c5_40, %143] : memref<12x8xf32, #tpu.memory_space<smem>>
      %c6_41 = arith.constant 6 : index
      %145 = arith.index_cast %arg6 : i32 to index
      %146 = memref.load %arg2[%c6_41, %145] : memref<12x8xf32, #tpu.memory_space<smem>>
      %c7_42 = arith.constant 7 : index
      %147 = arith.index_cast %arg6 : i32 to index
      %148 = memref.load %arg2[%c7_42, %147] : memref<12x8xf32, #tpu.memory_space<smem>>
      %c8 = arith.constant 8 : index
      %149 = arith.index_cast %arg6 : i32 to index
      %150 = memref.load %arg2[%c8, %149] : memref<12x8xf32, #tpu.memory_space<smem>>
      %c9 = arith.constant 9 : index
      %151 = arith.index_cast %arg6 : i32 to index
      %152 = memref.load %arg2[%c9, %151] : memref<12x8xf32, #tpu.memory_space<smem>>
      %c10 = arith.constant 10 : index
      %153 = arith.index_cast %arg6 : i32 to index
      %154 = memref.load %arg2[%c10, %153] : memref<12x8xf32, #tpu.memory_space<smem>>
      %c11 = arith.constant 11 : index
      %155 = arith.index_cast %arg6 : i32 to index
      %156 = memref.load %arg2[%c11, %155] : memref<12x8xf32, #tpu.memory_space<smem>>
      %157 = vector.broadcast %134 : f32 to vector<8x64xf32>
      %158 = arith.mulf %157, %115 : vector<8x64xf32>
      %159 = vector.broadcast %136 : f32 to vector<8x64xf32>
      %160 = arith.mulf %159, %85 : vector<8x64xf32>
      %161 = arith.addf %158, %160 : vector<8x64xf32>
      %162 = vector.broadcast %138 : f32 to vector<8x64xf32>
      %163 = arith.mulf %162, %90 : vector<8x64xf32>
      %164 = arith.addf %161, %163 : vector<8x64xf32>
      %165 = vector.broadcast %140 : f32 to vector<8x64xf32>
      %166 = arith.addf %164, %165 : vector<8x64xf32>
      %cst_43 = arith.constant 0.00999999977 : f32
      %167 = vector.broadcast %cst_43 : f32 to vector<8x64xf32>
      %168 = arith.mulf %167, %166 : vector<8x64xf32>
      %169 = arith.maximumf %166, %168 : vector<8x64xf32>
      %170 = vector.broadcast %134 : f32 to vector<8x64xf32>
      %171 = arith.mulf %170, %85 : vector<8x64xf32>
      %172 = vector.broadcast %136 : f32 to vector<8x64xf32>
      %173 = arith.mulf %172, %90 : vector<8x64xf32>
      %174 = arith.addf %171, %173 : vector<8x64xf32>
      %175 = vector.broadcast %138 : f32 to vector<8x64xf32>
      %176 = arith.mulf %175, %117 : vector<8x64xf32>
      %177 = arith.addf %174, %176 : vector<8x64xf32>
      %178 = vector.broadcast %140 : f32 to vector<8x64xf32>
      %179 = arith.addf %177, %178 : vector<8x64xf32>
      %cst_44 = arith.constant 0.00999999977 : f32
      %180 = vector.broadcast %cst_44 : f32 to vector<8x64xf32>
      %181 = arith.mulf %180, %179 : vector<8x64xf32>
      %182 = arith.maximumf %179, %181 : vector<8x64xf32>
      %183 = arith.maximumf %169, %182 : vector<8x64xf32>
      %184 = vector.broadcast %142 : f32 to vector<8x64xf32>
      %185 = arith.mulf %184, %119 : vector<8x64xf32>
      %186 = vector.broadcast %144 : f32 to vector<8x64xf32>
      %187 = arith.mulf %186, %95 : vector<8x64xf32>
      %188 = arith.addf %185, %187 : vector<8x64xf32>
      %189 = vector.broadcast %146 : f32 to vector<8x64xf32>
      %190 = arith.mulf %189, %100 : vector<8x64xf32>
      %191 = arith.addf %188, %190 : vector<8x64xf32>
      %192 = vector.broadcast %148 : f32 to vector<8x64xf32>
      %193 = arith.addf %191, %192 : vector<8x64xf32>
      %cst_45 = arith.constant 0.00999999977 : f32
      %194 = vector.broadcast %cst_45 : f32 to vector<8x64xf32>
      %195 = arith.mulf %194, %193 : vector<8x64xf32>
      %196 = arith.maximumf %193, %195 : vector<8x64xf32>
      %197 = vector.broadcast %142 : f32 to vector<8x64xf32>
      %198 = arith.mulf %197, %95 : vector<8x64xf32>
      %199 = vector.broadcast %144 : f32 to vector<8x64xf32>
      %200 = arith.mulf %199, %100 : vector<8x64xf32>
      %201 = arith.addf %198, %200 : vector<8x64xf32>
      %202 = vector.broadcast %146 : f32 to vector<8x64xf32>
      %203 = arith.mulf %202, %121 : vector<8x64xf32>
      %204 = arith.addf %201, %203 : vector<8x64xf32>
      %205 = vector.broadcast %148 : f32 to vector<8x64xf32>
      %206 = arith.addf %204, %205 : vector<8x64xf32>
      %cst_46 = arith.constant 0.00999999977 : f32
      %207 = vector.broadcast %cst_46 : f32 to vector<8x64xf32>
      %208 = arith.mulf %207, %206 : vector<8x64xf32>
      %209 = arith.maximumf %206, %208 : vector<8x64xf32>
      %210 = arith.maximumf %196, %209 : vector<8x64xf32>
      %211 = vector.broadcast %150 : f32 to vector<8x64xf32>
      %212 = arith.mulf %211, %123 : vector<8x64xf32>
      %213 = vector.broadcast %152 : f32 to vector<8x64xf32>
      %214 = arith.mulf %213, %103 : vector<8x64xf32>
      %215 = arith.addf %212, %214 : vector<8x64xf32>
      %216 = vector.broadcast %154 : f32 to vector<8x64xf32>
      %217 = arith.mulf %216, %106 : vector<8x64xf32>
      %218 = arith.addf %215, %217 : vector<8x64xf32>
      %219 = vector.broadcast %156 : f32 to vector<8x64xf32>
      %220 = arith.addf %218, %219 : vector<8x64xf32>
      %cst_47 = arith.constant 0.00999999977 : f32
      %221 = vector.broadcast %cst_47 : f32 to vector<8x64xf32>
      %222 = arith.mulf %221, %220 : vector<8x64xf32>
      %223 = arith.maximumf %220, %222 : vector<8x64xf32>
      %224 = vector.broadcast %150 : f32 to vector<8x64xf32>
      %225 = arith.mulf %224, %103 : vector<8x64xf32>
      %226 = vector.broadcast %152 : f32 to vector<8x64xf32>
      %227 = arith.mulf %226, %106 : vector<8x64xf32>
      %228 = arith.addf %225, %227 : vector<8x64xf32>
      %229 = vector.broadcast %154 : f32 to vector<8x64xf32>
      %230 = arith.mulf %229, %109 : vector<8x64xf32>
      %231 = arith.addf %228, %230 : vector<8x64xf32>
      %232 = vector.broadcast %156 : f32 to vector<8x64xf32>
      %233 = arith.addf %231, %232 : vector<8x64xf32>
      %cst_48 = arith.constant 0.00999999977 : f32
      %234 = vector.broadcast %cst_48 : f32 to vector<8x64xf32>
      %235 = arith.mulf %234, %233 : vector<8x64xf32>
      %236 = arith.maximumf %233, %235 : vector<8x64xf32>
      %237 = vector.broadcast %150 : f32 to vector<8x64xf32>
      %238 = arith.mulf %237, %106 : vector<8x64xf32>
      %239 = vector.broadcast %152 : f32 to vector<8x64xf32>
      %240 = arith.mulf %239, %109 : vector<8x64xf32>
      %241 = arith.addf %238, %240 : vector<8x64xf32>
      %242 = vector.broadcast %154 : f32 to vector<8x64xf32>
      %243 = arith.mulf %242, %112 : vector<8x64xf32>
      %244 = arith.addf %241, %243 : vector<8x64xf32>
      %245 = vector.broadcast %156 : f32 to vector<8x64xf32>
      %246 = arith.addf %244, %245 : vector<8x64xf32>
      %cst_49 = arith.constant 0.00999999977 : f32
      %247 = vector.broadcast %cst_49 : f32 to vector<8x64xf32>
      %248 = arith.mulf %247, %246 : vector<8x64xf32>
      %249 = arith.maximumf %246, %248 : vector<8x64xf32>
      %250 = vector.broadcast %150 : f32 to vector<8x64xf32>
      %251 = arith.mulf %250, %109 : vector<8x64xf32>
      %252 = vector.broadcast %152 : f32 to vector<8x64xf32>
      %253 = arith.mulf %252, %112 : vector<8x64xf32>
      %254 = arith.addf %251, %253 : vector<8x64xf32>
      %255 = vector.broadcast %154 : f32 to vector<8x64xf32>
      %256 = arith.mulf %255, %125 : vector<8x64xf32>
      %257 = arith.addf %254, %256 : vector<8x64xf32>
      %258 = vector.broadcast %156 : f32 to vector<8x64xf32>
      %259 = arith.addf %257, %258 : vector<8x64xf32>
      %cst_50 = arith.constant 0.00999999977 : f32
      %260 = vector.broadcast %cst_50 : f32 to vector<8x64xf32>
      %261 = arith.mulf %260, %259 : vector<8x64xf32>
      %262 = arith.maximumf %259, %261 : vector<8x64xf32>
      %263 = arith.maximumf %223, %236 : vector<8x64xf32>
      %264 = arith.maximumf %249, %262 : vector<8x64xf32>
      %265 = arith.addf %263, %264 : vector<8x64xf32>
      %cst_51 = arith.constant dense<0.000000e+00> : vector<8xf32>
      %266 = vector.multi_reduction <add>, %183, %cst_51 [1] : vector<8x64xf32> to vector<8xf32>
      %267 = vector.shape_cast %266 : vector<8xf32> to vector<8x1xf32>
      %cst_52 = arith.constant dense<0.000000e+00> : vector<8xf32>
      %268 = vector.multi_reduction <add>, %210, %cst_52 [1] : vector<8x64xf32> to vector<8xf32>
      %269 = vector.shape_cast %268 : vector<8xf32> to vector<8x1xf32>
      %cst_53 = arith.constant dense<0.000000e+00> : vector<8xf32>
      %270 = vector.multi_reduction <add>, %265, %cst_53 [1] : vector<8x64xf32> to vector<8xf32>
      %271 = vector.shape_cast %270 : vector<8xf32> to vector<8x1xf32>
      %272 = arith.index_cast %arg6 : i32 to index
      %c0_54 = arith.constant 0 : index
      %c0_55 = arith.constant 0 : index
      %273 = vector.load %arg3[%272, %c0_54, %c0_55] : memref<8x3x5xf32, #tpu.memory_space<vmem>>, vector<1x3x5xf32>
      %274 = vector.shape_cast %273 : vector<1x3x5xf32> to vector<3x5xf32>
      %275 = vector.extract_strided_slice %274 {offsets = [0, 0], sizes = [1, 5], strides = [1, 1]} : vector<3x5xf32> to vector<1x5xf32>
      %276 = vector.broadcast %267 : vector<8x1xf32> to vector<8x5xf32>
      %277 = vector.broadcast %275 : vector<1x5xf32> to vector<8x5xf32>
      %278 = arith.mulf %276, %277 : vector<8x5xf32>
      %279 = arith.addf %arg7, %278 : vector<8x5xf32>
      %280 = vector.extract_strided_slice %274 {offsets = [1, 0], sizes = [1, 5], strides = [1, 1]} : vector<3x5xf32> to vector<1x5xf32>
      %281 = vector.broadcast %269 : vector<8x1xf32> to vector<8x5xf32>
      %282 = vector.broadcast %280 : vector<1x5xf32> to vector<8x5xf32>
      %283 = arith.mulf %281, %282 : vector<8x5xf32>
      %284 = arith.addf %279, %283 : vector<8x5xf32>
      %285 = vector.extract_strided_slice %274 {offsets = [2, 0], sizes = [1, 5], strides = [1, 1]} : vector<3x5xf32> to vector<1x5xf32>
      %286 = vector.broadcast %271 : vector<8x1xf32> to vector<8x5xf32>
      %287 = vector.broadcast %285 : vector<1x5xf32> to vector<8x5xf32>
      %288 = arith.mulf %286, %287 : vector<8x5xf32>
      %289 = arith.addf %284, %288 : vector<8x5xf32>
      scf.yield %289 : vector<8x5xf32>
    }
    %c8_i32_30 = arith.constant 8 : i32
    %c0_31 = arith.constant 0 : index
    %c0_32 = arith.constant 0 : index
    %129 = vector.load %arg4[%c0_31, %c0_32] : memref<1x5xf32, #tpu.memory_space<vmem>>, vector<1x5xf32>
    %130 = vector.broadcast %129 : vector<1x5xf32> to vector<8x5xf32>
    %131 = arith.addf %128, %130 : vector<8x5xf32>
    %c0_33 = arith.constant 0 : index
    %c0_34 = arith.constant 0 : index
    %132 = vector.load %arg5[%c0_33, %c0_34] : memref<8x5xf32, #tpu.memory_space<vmem>>, vector<8x5xf32>
    tpu.vector_store %arg5[%c0_33, %c0_34], %131 {strides = array<i32>} : memref<8x5xf32, #tpu.memory_space<vmem>>, vector<8x5xf32>,
    return
  }
  func.func @transform_0(%arg0: i32) -> (i32, i32, i32) {
    %c0_i32 = arith.constant 0 : i32
    %c0_i32_0 = arith.constant 0 : i32
    %c0_i32_1 = arith.constant 0 : i32
    return %c0_i32, %arg0, %c0_i32_0 : i32, i32, i32
  }
  func.func @transform_1(%arg0: i32) -> (i32, i32) {
    %c0_i32 = arith.constant 0 : i32
    %c0_i32_0 = arith.constant 0 : i32
    %c0_i32_1 = arith.constant 0 : i32
    return %c0_i32, %c0_i32_0 : i32, i32
  }
  func.func @transform_2(%arg0: i32) -> (i32, i32, i32) {
    %c0_i32 = arith.constant 0 : i32
    %c0_i32_0 = arith.constant 0 : i32
    %c0_i32_1 = arith.constant 0 : i32
    %c0_i32_2 = arith.constant 0 : i32
    return %c0_i32, %c0_i32_0, %c0_i32_1 : i32, i32, i32
  }
  func.func @transform_3(%arg0: i32) -> (i32, i32) {
    %c0_i32 = arith.constant 0 : i32
    %c0_i32_0 = arith.constant 0 : i32
    %c0_i32_1 = arith.constant 0 : i32
    return %c0_i32, %c0_i32_0 : i32, i32
  }
  func.func @transform_4(%arg0: i32) -> (i32, i32) {
    %c0_i32 = arith.constant 0 : i32
    %c0_i32_0 = arith.constant 0 : i32
    return %arg0, %c0_i32 : i32, i32
  }
}

</mosaic_0001>

<llo_original>
// kernel: tpu_custom_call.1
$region0: #{tpu_custom_call.1}
  #allocation0 [shape = 'u32[]', space=smem, size = 0x4, offset = 0x4, fixed_abs, tag = 'smem constant byte address 0x4 - core index']
  #allocation1 [shape = 'u32[72,128]{1,0:T(1,128)}', space=vmem, size = 0x9000, scoped, tag = 'internal scratch']
  %s0 = inlined_call_operand.hbm [shape: f32[8,8,64], index: 0, kind: input, shape index: {}]
  %s1 = inlined_call_operand.vmem [shape: f32[12,8], index: 1, kind: input, shape index: {}]
  %s2 = inlined_call_operand.vmem [shape: f32[8,3,5], index: 2, kind: input, shape index: {}]
  %s3 = inlined_call_operand.vmem [shape: f32[1,5], index: 3, kind: input, shape index: {}]
  %s4 = inlined_call_operand.hbm [shape: f32[8,5], index: 4, kind: output, shape index: {}]
  %s5 = sld [smem:[#allocation0]]
  $region41: #{tpu_custom_call.1} parent=0
    _
  %s7 = ssub.s32 1, %s5
  %s8 = scalar_select 0, %s7, %s5
  $region1: #{tpu_custom_call.1} parent=0
    #allocation2 [shape = 'u8[32768]{0}', space=vmem, size = 0x8000, scoped, tag = 'input window, operand 0, single buffered']
    #allocation3 [shape = 's32[1]{0}', space=sflag, size = 0x4, scoped, tag = 'scoped memory for tpu_custom_call.1']
    #allocation4 [shape = 's32[1]{0}', space=sflag, size = 0x4, scoped, tag = 'scoped memory for tpu_custom_call.1']
    #allocation5 [shape = 's32[1]{0}', space=sflag, size = 0x4, scoped, tag = 'scoped memory for tpu_custom_call.1']
    #allocation6 [shape = 'u8[8192]{0}', space=smem, size = 0x2000, scoped, tag = 'input window, operand 1, single buffered']
    #allocation7 [shape = 'u8[4096]{0}', space=vmem, size = 0x1000, scoped, tag = 'output window, operand 0, single buffered']
    %9 = vsyncpa [#allocation3], 0
    %10 = vsyncpa [#allocation5], 0
    %11 = vsyncpa [#allocation4], 0
    // Predicated region
    $region2: #{tpu_custom_call.1} parent=1 // pred_check
      _
    $region3: #{tpu_custom_call.1} parent=1 // pred_check_branch
      %13 = sbr.rel (0) target = $region5
    $region4: #{tpu_custom_call.1} parent=1 // pred_region
      %15 = vsyncadd [#allocation3], 0
      %s16 = sshll.u32 %s0, 4
      %s17 = int_to_ptr.hbm [resolvable:$true] %s16
      %s18 = sshll.u32 [#allocation2], 4
      %s19 = int_to_ptr.vmem [resolvable:$true] %s18
      %24 = dma.hbm_to_vmem [thread:$0]  %s17, 1024, %s19, [#allocation3], 128, 128, 8
    $region5: #{tpu_custom_call.1} parent=1 // pred_fallthru
      _
    // Predicated region
    $region6: #{tpu_custom_call.1} parent=1 // pred_check
      _
    $region7: #{tpu_custom_call.1} parent=1 // pred_check_branch
      %26 = sbr.rel (0) target = $region9
    $region8: #{tpu_custom_call.1} parent=1 // pred_region
      %28 = vsyncadd [#allocation5], 0
      %s29 = sshll.u32 %s1, 4
      %s30 = int_to_ptr.vmem [resolvable:$true] %s29
      %35 = dma.vmem_to_smem %s30, 256, [#allocation6], [#allocation5], 128, 128, 8
    $region9: #{tpu_custom_call.1} parent=1 // pred_fallthru
      _
    // Predicated region
    $region10: #{tpu_custom_call.1} parent=1 // pred_check
      _
    $region11: #{tpu_custom_call.1} parent=1 // pred_check_branch
      %37 = sbr.rel (0) target = $region13
    $region12: #{tpu_custom_call.1} parent=1 // pred_region
      _
    $region13: #{tpu_custom_call.1} parent=1 // pred_fallthru
      _
    // Predicated region
    $region14: #{tpu_custom_call.1} parent=1 // pred_check
      _
    $region15: #{tpu_custom_call.1} parent=1 // pred_check_branch
      %39 = sbr.rel (0) target = $region17
    $region16: #{tpu_custom_call.1} parent=1 // pred_region
      _
    $region17: #{tpu_custom_call.1} parent=1 // pred_fallthru
      _
    // Predicated region
    $region18: #{tpu_custom_call.1} parent=1 // pred_check
      _
    $region19: #{tpu_custom_call.1} parent=1 // pred_check_branch
      %41 = sbr.rel (0) target = $region21
    $region20: #{tpu_custom_call.1} parent=1 // pred_region
      %43 = dma.done [#allocation3], 1024
    $region21: #{tpu_custom_call.1} parent=1 // pred_fallthru
      _
    // Predicated region
    $region22: #{tpu_custom_call.1} parent=1 // pred_check
      _
    $region23: #{tpu_custom_call.1} parent=1 // pred_check_branch
      %45 = sbr.rel (0) target = $region25
    $region24: #{tpu_custom_call.1} parent=1 // pred_region
      %47 = dma.done [#allocation5], 256
    $region25: #{tpu_custom_call.1} parent=1 // pred_fallthru
      _
    %48 = sfence
    %v49 = vld [vmem:[#allocation2] sm:$0xff]
    %s50 = scalar_lea.vmem [#allocation2], 8
    %v51 = vld [vmem:[%s50] sm:$0xff]
    %s52 = scalar_lea.vmem [#allocation2], 16
    %v53 = vld [vmem:[%s52] sm:$0xff]
    %s54 = scalar_lea.vmem [#allocation2], 24
    %v55 = vld [vmem:[%s54] sm:$0xff]
    %s56 = scalar_lea.vmem [#allocation2], 32
    %v57 = vld [vmem:[%s56] sm:$0xff]
    %s58 = scalar_lea.vmem [#allocation2], 40
    %v59 = vld [vmem:[%s58] sm:$0xff]
    %s60 = scalar_lea.vmem [#allocation2], 48
    %v61 = vld [vmem:[%s60] sm:$0xff]
    %s62 = scalar_lea.vmem [#allocation2], 56
    %v63 = vld [vmem:[%s62] sm:$0xff]
    %v64 = vadd.f32 %v49, %v51
    %v65 = vadd.f32 %v64, %v53
    %v66 = vadd.f32 %v65, %v55
    %v67 = vadd.f32 %v66, %v57
    %v68 = vadd.f32 %v67, %v59
    %v69 = vadd.f32 %v68, %v61
    %v70 = vadd.f32 %v69, %v63
    %vm71 = vcmask 523264
    %v72 = vsel %vm71, %v70, 0.0
    %73 = vadd.xlane.f32.xlu0 %v72
    %v74 = vpop.xlane.xlu0 %73
    %v75 = vmul.f32 %v74, 0.001953125
    %v76 = vsub.f32 %v49, %v75
    %v77 = vsub.f32 %v51, %v75
    %v78 = vsub.f32 %v53, %v75
    %v79 = vsub.f32 %v55, %v75
    %v80 = vsub.f32 %v57, %v75
    %v81 = vsub.f32 %v59, %v75
    %v82 = vsub.f32 %v61, %v75
    %v83 = vsub.f32 %v63, %v75
    %v84 = vmul.f32 %v76, %v76
    %v85 = vmul.f32 %v77, %v77
    %v86 = vadd.f32 %v84, %v85
    %v87 = vmul.f32 %v78, %v78
    %v88 = vadd.f32 %v86, %v87
    %v89 = vmul.f32 %v79, %v79
    %v90 = vadd.f32 %v88, %v89
    %v91 = vmul.f32 %v80, %v80
    %v92 = vadd.f32 %v90, %v91
    %v93 = vmul.f32 %v81, %v81
    %v94 = vadd.f32 %v92, %v93
    %v95 = vmul.f32 %v82, %v82
    %v96 = vadd.f32 %v94, %v95
    %v97 = vmul.f32 %v83, %v83
    %v98 = vadd.f32 %v96, %v97
    %v99 = vsel %vm71, %v98, 0.0
    %100 = vadd.xlane.f32.xlu0 %v99
    %v101 = vpop.xlane.xlu0 %100
    %v102 = vmul.f32 %v101, 0.001953125
    %v103 = vadd.f32 %v102, 1e-05
    %v104 = vrsqrt.pop %v103
    %v105 = vmul.f32 %v104, %v103
    %v106 = vmul.f32 %v105, %v104
    %v107 = vmul.f32 0.5, %v106
    %v108 = vsub.f32 1.5, %v107
    %v109 = vmul.f32 %v104, %v108
    %vm110 = vweird.f32 %v103
    %vm111 = vweird.f32 %v104
    %vm112 = vmor %vm110, %vm111
    %v113 = vsel %vm112, %v104, %v109
    %v114 = vmul.f32 %v76, %v113
    %v115 = vmul.f32 %v77, %v113
    %v116 = vmul.f32 %v78, %v113
    %v117 = vmul.f32 %v79, %v113
    %v118 = vmul.f32 %v80, %v113
    %v119 = vmul.f32 %v81, %v113
    %v120 = vmul.f32 %v82, %v113
    %v121 = vmul.f32 %v83, %v113
    %v122 = vadd.f32 %v114, %v115
    %v123 = vadd.f32 %v122, %v116
    %v124 = vadd.f32 %v123, %v117
    %v125 = vmul.f32 %v124, 0.5
    %v126 = vadd.f32 %v118, %v119
    %v127 = vadd.f32 %v126, %v120
    %v128 = vadd.f32 %v127, %v121
    %v129 = vmul.f32 %v128, 0.5
    %v130 = vsub.f32 %v122, %v116
    %v131 = vsub.f32 %v130, %v117
    %v132 = vmul.f32 %v131, 0.5
    %v133 = vsub.f32 %v126, %v120
    %v134 = vsub.f32 %v133, %v121
    %v135 = vmul.f32 %v134, 0.5
    %v136 = vsub.f32 %v114, %v115
    %v137 = vmul.f32 %v136, 0.70710677
    %v138 = vsub.f32 %v116, %v117
    %v139 = vmul.f32 %v138, 0.70710677
    %v140 = vsub.f32 %v118, %v119
    %v141 = vmul.f32 %v140, 0.70710677
    %v142 = vsub.f32 %v120, %v121
    %v143 = vmul.f32 %v142, 0.70710677
    %145 = vrot.lane.b32.xlu0 %v129, 1
    %v146 = vpop.permute.xlu0 %145
    %vm148 = vcmask 7168
    %v149 = vsel %vm148, 0.0, %v146
    %151 = vrot.lane.b32.xlu0 %v125, 127
    %v152 = vpop.permute.xlu0 %151
    %vm154 = vcmask 515072
    %v155 = vsel %vm154, %v152, 0.0
    %157 = vrot.lane.b32.xlu0 %v135, 1
    %v158 = vpop.permute.xlu0 %157
    %v160 = vsel %vm148, 0.0, %v158
    %162 = vrot.lane.b32.xlu0 %v132, 127
    %v163 = vpop.permute.xlu0 %162
    %v165 = vsel %vm154, %v163, 0.0
    %167 = vrot.lane.b32.xlu0 %v143, 1
    %v168 = vpop.permute.xlu0 %167
    %v170 = vsel %vm148, 0.0, %v168
    %172 = vrot.lane.b32.xlu0 %v137, 127
    %v173 = vpop.permute.xlu0 %172
    %v175 = vsel %vm154, %v173, 0.0
    loop: start=0, step=1, limit=8
    $region26: #{tpu_custom_call.1} parent=1 // loop_pre_header
      _
    $region27: #{tpu_custom_call.1} parent=1 // loop_header
      %s177 = sphi 0, %s181
      %p178 = scmp.ge.s32.totalorder %s177, 8
      %v182 = vphi 0.0, %v333
    $region28: #{tpu_custom_call.1} parent=1 // loop_header_branch
      %180 = sbr.rel (%p178) target = $region32
    $region29: #{tpu_custom_call.1} parent=1 // loop_body
      %s183 = sld [smem:[#allocation6 + %s177]]
      %s184 = sshra.s32 %s177, 7
      %s185 = sand.u32 %s177, 127
      %s186 = sadd.s32 %s184, 1
      %s187 = smul.u32 %s186, 128
      %s188 = sshra.s32 %s177, 7
      %s189 = sand.u32 %s177, 127
      %s190 = sadd.s32 %s187, %s189
      %s191 = sld [smem:[#allocation6 + %s190]]
      %s192 = sadd.s32 %s184, 2
      %s193 = smul.u32 %s192, 128
      %s194 = sadd.s32 %s193, %s189
      %s195 = sld [smem:[#allocation6 + %s194]]
      %s196 = sadd.s32 %s184, 3
      %s197 = smul.u32 %s196, 128
      %s198 = sadd.s32 %s197, %s189
      %s199 = sld [smem:[#allocation6 + %s198]]
      %s200 = sadd.s32 %s184, 4
      %s201 = smul.u32 %s200, 128
      %s202 = sadd.s32 %s201, %s189
      %s203 = sld [smem:[#allocation6 + %s202]]
      %s204 = sadd.s32 %s184, 5
      %s205 = smul.u32 %s204, 128
      %s206 = sadd.s32 %s205, %s189
      %s207 = sld [smem:[#allocation6 + %s206]]
      %s208 = sadd.s32 %s184, 6
      %s209 = smul.u32 %s208, 128
      %s210 = sadd.s32 %s209, %s189
      %s211 = sld [smem:[#allocation6 + %s210]]
      %s212 = sadd.s32 %s184, 7
      %s213 = smul.u32 %s212, 128
      %s214 = sadd.s32 %s213, %s189
      %s215 = sld [smem:[#allocation6 + %s214]]
      %s216 = sadd.s32 %s184, 8
      %s217 = smul.u32 %s216, 128
      %s218 = sadd.s32 %s217, %s189
      %s219 = sld [smem:[#allocation6 + %s218]]
      %s220 = sadd.s32 %s184, 9
      %s221 = smul.u32 %s220, 128
      %s222 = sadd.s32 %s221, %s189
      %s223 = sld [smem:[#allocation6 + %s222]]
      %s224 = sadd.s32 %s184, 10
      %s225 = smul.u32 %s224, 128
      %s226 = sadd.s32 %s225, %s189
      %s227 = sld [smem:[#allocation6 + %s226]]
      %s228 = sadd.s32 %s184, 11
      %s229 = smul.u32 %s228, 128
      %s230 = sadd.s32 %s229, %s189
      %s231 = sld [smem:[#allocation6 + %s230]]
      %v232 = vstv %s183
      %v233 = vmul.f32 %v232, %v149
      %v234 = vstv %s191
      %v235 = vmul.f32 %v234, %v125
      %v236 = vadd.f32 %v233, %v235
      %v237 = vstv %s195
      %v238 = vmul.f32 %v237, %v129
      %v239 = vadd.f32 %v236, %v238
      %v240 = vstv %s199
      %v241 = vadd.f32 %v239, %v240
      %v242 = vmul.f32 %v241, 0.01
      %v243 = vmax.f32 %v241, %v242
      %v244 = vmul.f32 %v232, %v125
      %v245 = vmul.f32 %v234, %v129
      %v246 = vadd.f32 %v244, %v245
      %v247 = vmul.f32 %v237, %v155
      %v248 = vadd.f32 %v246, %v247
      %v249 = vadd.f32 %v248, %v240
      %v250 = vmul.f32 %v249, 0.01
      %v251 = vmax.f32 %v249, %v250
      %v252 = vmax.f32 %v243, %v251
      %v253 = vstv %s203
      %v254 = vmul.f32 %v253, %v160
      %v255 = vstv %s207
      %v256 = vmul.f32 %v255, %v132
      %v257 = vadd.f32 %v254, %v256
      %v258 = vstv %s211
      %v259 = vmul.f32 %v258, %v135
      %v260 = vadd.f32 %v257, %v259
      %v261 = vstv %s215
      %v262 = vadd.f32 %v260, %v261
      %v263 = vmul.f32 %v262, 0.01
      %v264 = vmax.f32 %v262, %v263
      %v265 = vmul.f32 %v253, %v132
      %v266 = vmul.f32 %v255, %v135
      %v267 = vadd.f32 %v265, %v266
      %v268 = vmul.f32 %v258, %v165
      %v269 = vadd.f32 %v267, %v268
      %v270 = vadd.f32 %v269, %v261
      %v271 = vmul.f32 %v270, 0.01
      %v272 = vmax.f32 %v270, %v271
      %v273 = vmax.f32 %v264, %v272
      %v274 = vstv %s219
      %v275 = vmul.f32 %v274, %v170
      %v276 = vstv %s223
      %v277 = vmul.f32 %v276, %v137
      %v278 = vadd.f32 %v275, %v277
      %v279 = vstv %s227
      %v280 = vmul.f32 %v279, %v139
      %v281 = vadd.f32 %v278, %v280
      %v282 = vstv %s231
      %v283 = vadd.f32 %v281, %v282
      %v284 = vmul.f32 %v283, 0.01
      %v285 = vmax.f32 %v283, %v284
      %v286 = vmul.f32 %v274, %v137
      %v287 = vmul.f32 %v276, %v139
      %v288 = vadd.f32 %v286, %v287
      %v289 = vmul.f32 %v279, %v141
      %v290 = vadd.f32 %v288, %v289
      %v291 = vadd.f32 %v290, %v282
      %v292 = vmul.f32 %v291, 0.01
      %v293 = vmax.f32 %v291, %v292
      %v294 = vmul.f32 %v274, %v139
      %v295 = vmul.f32 %v276, %v141
      %v296 = vadd.f32 %v294, %v295
      %v297 = vmul.f32 %v279, %v143
      %v298 = vadd.f32 %v296, %v297
      %v299 = vadd.f32 %v298, %v282
      %v300 = vmul.f32 %v299, 0.01
      %v301 = vmax.f32 %v299, %v300
      %v302 = vmul.f32 %v274, %v141
      %v303 = vmul.f32 %v276, %v143
      %v304 = vadd.f32 %v302, %v303
      %v305 = vmul.f32 %v279, %v175
      %v306 = vadd.f32 %v304, %v305
      %v307 = vadd.f32 %v306, %v282
      %v308 = vmul.f32 %v307, 0.01
      %v309 = vmax.f32 %v307, %v308
      %v310 = vmax.f32 %v285, %v293
      %v311 = vmax.f32 %v301, %v309
      %v312 = vadd.f32 %v310, %v311
      %v313 = vsel %vm71, %v252, 0.0
      %314 = vadd.xlane.f32.xlu0 %v313
      %v315 = vpop.xlane.xlu0 %314
      %v316 = vsel %vm71, %v273, 0.0
      %317 = vadd.xlane.f32.xlu0 %v316
      %v318 = vpop.xlane.xlu0 %317
      %v319 = vsel %vm71, %v312, 0.0
      %320 = vadd.xlane.f32.xlu0 %v319
      %v321 = vpop.xlane.xlu0 %320
      %s322 = smul.u32 %s177, 4
      %s323 = scalar_lea.vmem %s2, %s322
      %v324 = vld [vmem:[%s323] sm:$0x7]
      %v325 = vperm.slane %v324, 0
      %v326 = vmul.f32 %v315, %v325
      %v327 = vadd.f32 %v182, %v326
      %v328 = vperm.slane %v324, 1
      %v329 = vmul.f32 %v318, %v328
      %v330 = vadd.f32 %v327, %v329
      %v331 = vperm.slane %v324, 2
      %v332 = vmul.f32 %v321, %v331
      %v333 = vadd.f32 %v330, %v332
    $region30: #{tpu_custom_call.1} parent=1 // loop_footer
      %s181 = sadd.s32 1, %s177
    $region31: #{tpu_custom_call.1} parent=1 // loop_footer_branch
      %176 = sbr.rel target = $region27
    $region32: #{tpu_custom_call.1} parent=1 // loop_exit
      _
    %v334 = vld [vmem:[%s3] sm:$0x1]
    %v336 = vperm.slane %v334, 0
    %v338 = vadd.f32 %v182, %v336
    %vm339 = vcmask 39936
    %340 = vst.msk [vmem:[#allocation7] sm:$0xff] %vm339, %v338
    // Predicated region
    $region33: #{tpu_custom_call.1} parent=1 // pred_check
      _
    $region34: #{tpu_custom_call.1} parent=1 // pred_check_branch
      %342 = sbr.rel (0) target = $region36
    $region35: #{tpu_custom_call.1} parent=1 // pred_region
      %344 = vsyncadd [#allocation4], 0
      %s346 = sshll.u32 [#allocation7], 4
      %s347 = int_to_ptr.vmem [resolvable:$true] %s346
      %s348 = sshll.u32 %s4, 4
      %s349 = int_to_ptr.hbm [resolvable:$true] %s348
      %351 = dma.vmem_to_hbm [thread:$0]  %s347, 128, %s349, [#allocation4]
    $region36: #{tpu_custom_call.1} parent=1 // pred_fallthru
      _
    // Predicated region
    $region37: #{tpu_custom_call.1} parent=1 // pred_check
      _
    $region38: #{tpu_custom_call.1} parent=1 // pred_check_branch
      %353 = sbr.rel (0) target = $region40
    $region39: #{tpu_custom_call.1} parent=1 // pred_region
      %355 = dma.done [#allocation4], 128
    $region40: #{tpu_custom_call.1} parent=1 // pred_fallthru
      _
    %356 = vsyncpa [#allocation3], 1
    %357 = vsyncpa [#allocation4], 1
    %358 = vsyncpa [#allocation5], 1

</llo_original>
